<compile_context>
chip_gen: v7x
topology: tpu7x:2x2x1
jax: 0.10.0
libtpu: 0.0.40
codegen_flags: <defaults>
</compile_context>

<pallas_src>
import jax
import jax.numpy as jnp
from jax.experimental import pallas as pl
from jax.experimental.pallas import tpu as pltpu

LANE = 128
SUBLANE = 8


def _round_up(n, m):
    return ((n + m - 1) // m) * m


def _tpu_kind():
    try:
        return jax.devices()[0].device_kind.lower()
    except Exception:
        return ""


def _tensorcores_per_chip():
    # v7x has 2 TensorCores per chip; v5e/v6e have 1.
    return 2 if "v7" in _tpu_kind() else 1


def _default_act_dtype():
    # v6e/v7x: bf16 VPU/EUP -> carry activations in bf16 between layers
    # (halves activation vreg/VMEM traffic, drops one cast per layer).
    # v5e (and older): no bf16 VALU/EUP -> keep elementwise work in f32.
    kind = _tpu_kind()
    return jnp.bfloat16 if ("v6" in kind or "v7" in kind) else jnp.float32


def _elu(v):
    # nn.ELU(alpha=1.0): v if v > 0 else exp(v) - 1
    return jnp.where(v > 0, v, jnp.exp(v) - jnp.asarray(1.0, v.dtype))


def _make_kernel(out_dim, act_dtype):
    def kernel(x_ref,
               w1, b1, w2, b2, w3, b3, w4, b4, w5, b5, w6, b6,
               o_ref):
        """Fused 6-layer MLP for one batch tile; weights stay VMEM-resident."""

        def hidden(h, w_ref, b_ref):
            # bf16 operands on the MXU, f32 accumulation; bias-add + ELU in
            # act_dtype (bf16 on v6e/v7x, f32 on v5e).
            acc = jnp.dot(h.astype(jnp.bfloat16), w_ref[...],
                          preferred_element_type=jnp.float32)
            v = acc.astype(act_dtype) + b_ref[...].astype(act_dtype)
            return _elu(v)

        h = x_ref[...]
        for w_ref, b_ref in ((w1, b1), (w2, b2), (w3, b3), (w4, b4), (w5, b5)):
            h = hidden(h, w_ref, b_ref)

        # Final layer: w6/b6 are lane-padded (MXU-friendly) but only the real
        # out_dim columns are written -> 4*out_dim bytes/row of HBM writeback.
        y = jnp.dot(h.astype(jnp.bfloat16), w6[...],
                    preferred_element_type=jnp.float32) + b6[...]
        o_ref[...] = y[:, :out_dim].astype(o_ref.dtype)

    return kernel


def _pad_params(params):
    """Zero-pad each layer's widths up to a multiple of 128 lanes (except the
    first layer's input dim); weights cast to bf16, biases stay f32.  Padded
    columns are exactly zero through bias-add and ELU, and the matching padded
    input rows of the next layer multiply zeros, so the math is exact."""
    padded = []
    for idx, (w, b) in enumerate(params):
        fan_in, fan_out = w.shape
        in_pad = fan_in if idx == 0 else _round_up(fan_in, LANE)
        out_pad = _round_up(fan_out, LANE)
        w_p = jnp.zeros((in_pad, out_pad), jnp.bfloat16)
        w_p = w_p.at[:fan_in, :fan_out].set(w.astype(jnp.bfloat16))
        b_p = jnp.zeros((1, out_pad), jnp.float32)
        b_p = b_p.at[:, :fan_out].set(b.astype(jnp.float32).reshape(1, fan_out))
        padded.append((w_p, b_p))
    return padded


def pod_ann_forward(x, params, *, batch_tile=2048, act_dtype=None):
    """x: [B, input_dim] float32; params: list of (W[in,out], b[1,out]) pairs."""
    B, in_dim = x.shape
    out_dim = params[-1][0].shape[1]
    if act_dtype is None:
        act_dtype = _default_act_dtype()
    num_cores = _tensorcores_per_chip()

    # ---- batch tiling ----------------------------------------------------
    # One big tile per TensorCore: at bt=2048 the VMEM footprint is a few MiB
    # (x block ~32 KB, intermediates <= 2 MiB, weights ~330 KB, output 64 KB),
    # well under the 32 MiB scoped default on every chip generation.
    bt = min(_round_up(batch_tile, SUBLANE), _round_up(B, SUBLANE))
    if num_cores > 1:
        # v7x only: guarantee >= num_cores grid steps so both TCs get work.
        # On single-TC chips extra grid steps are pure overhead, so skip this.
        while pl.cdiv(B, bt) < num_cores and bt > SUBLANE:
            bt = _round_up(pl.cdiv(bt, 2), SUBLANE)
    n_tiles = pl.cdiv(B, bt)
    if num_cores > 1 and n_tiles % num_cores != 0:
        n_tiles = _round_up(n_tiles, num_cores)
    b_pad = n_tiles * bt
    if b_pad != B:
        x = jnp.pad(x, ((0, b_pad - B), (0, 0)))

    padded_params = _pad_params(params)
    flat_params = [a for pair in padded_params for a in pair]

    # Weights/biases: full-extent blocks with constant index maps -> fetched
    # once (block index never changes across grid steps, so the pipeline does
    # not re-issue those DMAs); double-buffer VMEM cost is negligible, so an
    # explicit pipeline_mode=pl.Buffered(1) is not required.
    def full_spec(arr):
        return pl.BlockSpec(arr.shape, lambda i: (0, 0))

    in_specs = [pl.BlockSpec((bt, in_dim), lambda i: (i, 0))] + [
        full_spec(a) for a in flat_params
    ]
    # Lane-narrow output block: masked stores inside the kernel, but only
    # out_dim*4 bytes/row of HBM traffic and no wrapper re-copy.
    out_spec = pl.BlockSpec((bt, out_dim), lambda i: (i, 0))

    # Grid semantics: shard the batch axis across the two v7x TensorCores;
    # on 1-TC chips the grid is a serial loop.
    if num_cores > 1 and n_tiles >= num_cores and n_tiles % num_cores == 0:
        semantics = (pltpu.CORE_PARALLEL,)
    elif n_tiles > 1:
        semantics = ("parallel",)
    else:
        semantics = ("arbitrary",)

    # Advisory cost estimate (helps XLA schedule surrounding ops).
    flops = 0
    transcendentals = 0
    bytes_accessed = x.size * x.dtype.itemsize + b_pad * out_dim * 4
    for i, (w, b) in enumerate(params):
        flops += 2 * b_pad * w.shape[0] * w.shape[1] + b_pad * w.shape[1]
        if i < len(params) - 1:
            transcendentals += b_pad * w.shape[1]
        bytes_accessed += w.size * 2 + b.size * 4

    out = pl.pallas_call(
        _make_kernel(out_dim, act_dtype),
        out_shape=jax.ShapeDtypeStruct((b_pad, out_dim), jnp.float32),
        grid_spec=pl.GridSpec(
            grid=(n_tiles,),
            in_specs=in_specs,
            out_specs=out_spec,
        ),
        compiler_params=pltpu.CompilerParams(
            dimension_semantics=semantics,
        ),
        cost_estimate=pl.CostEstimate(
            flops=int(flops),
            transcendentals=int(transcendentals),
            bytes_accessed=int(bytes_accessed),
        ),
    )(x, *flat_params)

    # Only batch padding (if any) needs trimming; no lane padding on output.
    return out if b_pad == B else out[:B]


def init_params(key, input_dim, output_dim):
    """Deterministic init mirroring PyTorch Linear default (uniform +-1/sqrt(fan_in))."""
    dims = [input_dim, 32, 64, 128, 256, 256, output_dim]
    params = []
    for fan_in, fan_out in zip(dims[:-1], dims[1:]):
        key, kw, kb = jax.random.split(key, 3)
        bound = 1.0 / jnp.sqrt(jnp.float32(fan_in))
        # stored as [in, out] so the kernel computes x @ W + b (== PyTorch x @ W.T + b)
        w = jax.random.uniform(kw, (fan_in, fan_out), jnp.float32, -bound, bound)
        b = jax.random.uniform(kb, (1, fan_out), jnp.float32, -bound, bound)
        params.append((w, b))
    return params


def reference_forward(x, params, act_dtype):
    """Pure-JAX reference mirroring the kernel's dtype choices."""
    h = x
    n = len(params)
    for i, (w, b) in enumerate(params):
        acc = jnp.dot(h.astype(jnp.bfloat16), w.astype(jnp.bfloat16),
                      preferred_element_type=jnp.float32)
        if i < n - 1:
            v = acc.astype(act_dtype) + b.astype(act_dtype)
            h = _elu(v)
        else:
            h = acc + b.astype(jnp.float32)
    return h.astype(jnp.float32)


if __name__ == "__main__":
    key = jax.random.PRNGKey(0)
    input_dim, output_dim = 4, 8   # small POD latent dims
    batch = 16

    k_x, k_p = jax.random.split(key)
    x = jax.random.normal(k_x, (batch, input_dim), jnp.float32)
    params = init_params(k_p, input_dim, output_dim)

    act_dtype = _default_act_dtype()
    out = pod_ann_forward(x, params, act_dtype=act_dtype)
    out = jax.block_until_ready(out)

    ref = reference_forward(x, params, act_dtype)
    assert out.shape == (batch, output_dim)
    assert jnp.allclose(out, ref, atol=2e-2, rtol=2e-2), (
        "mismatch vs reference: max |diff| = %g"
        % float(jnp.max(jnp.abs(out - ref))))

    print("KERNEL_OK")
</pallas_src>

<mosaic_0001>
module attributes {stable_mosaic.version = 11 : i64} {
  func.func @kernel(%arg0: i32, %arg1: memref<16x4xf32, #tpu.memory_space<vmem>>, %arg2: memref<4x128xbf16, #tpu.memory_space<vmem>>, %arg3: memref<1x128xf32, #tpu.memory_space<vmem>>, %arg4: memref<128x128xbf16, #tpu.memory_space<vmem>>, %arg5: memref<1x128xf32, #tpu.memory_space<vmem>>, %arg6: memref<128x128xbf16, #tpu.memory_space<vmem>>, %arg7: memref<1x128xf32, #tpu.memory_space<vmem>>, %arg8: memref<128x256xbf16, #tpu.memory_space<vmem>>, %arg9: memref<1x256xf32, #tpu.memory_space<vmem>>, %arg10: memref<256x256xbf16, #tpu.memory_space<vmem>>, %arg11: memref<1x256xf32, #tpu.memory_space<vmem>>, %arg12: memref<256x128xbf16, #tpu.memory_space<vmem>>, %arg13: memref<1x128xf32, #tpu.memory_space<vmem>>, %arg14: memref<16x8xf32, #tpu.memory_space<vmem>>) attributes {dimension_semantics = [#tpu.dimension_semantics<arbitrary>], iteration_bounds = array<i64: 1>, scalar_prefetch = 0 : i64, scratch_operands = 0 : i64, tpu.core_type = #tpu.core_type<tc>, window_params = [{transform_indices = @transform_0, window_bounds = array<i64: 16, 4>}, {pipeline_mode = #tpu.pipeline_mode<synchronous>, transform_indices = @transform_1, window_bounds = array<i64: 4, 128>}, {pipeline_mode = #tpu.pipeline_mode<synchronous>, transform_indices = @transform_2, window_bounds = array<i64: 1, 128>}, {pipeline_mode = #tpu.pipeline_mode<synchronous>, transform_indices = @transform_3, window_bounds = array<i64: 128, 128>}, {pipeline_mode = #tpu.pipeline_mode<synchronous>, transform_indices = @transform_4, window_bounds = array<i64: 1, 128>}, {pipeline_mode = #tpu.pipeline_mode<synchronous>, transform_indices = @transform_5, window_bounds = array<i64: 128, 128>}, {pipeline_mode = #tpu.pipeline_mode<synchronous>, transform_indices = @transform_6, window_bounds = array<i64: 1, 128>}, {pipeline_mode = #tpu.pipeline_mode<synchronous>, transform_indices = @transform_7, window_bounds = array<i64: 128, 256>}, {pipeline_mode = #tpu.pipeline_mode<synchronous>, transform_indices = @transform_8, window_bounds = array<i64: 1, 256>}, {pipeline_mode = #tpu.pipeline_mode<synchronous>, transform_indices = @transform_9, window_bounds = array<i64: 256, 256>}, {pipeline_mode = #tpu.pipeline_mode<synchronous>, transform_indices = @transform_10, window_bounds = array<i64: 1, 256>}, {pipeline_mode = #tpu.pipeline_mode<synchronous>, transform_indices = @transform_11, window_bounds = array<i64: 256, 128>}, {pipeline_mode = #tpu.pipeline_mode<synchronous>, transform_indices = @transform_12, window_bounds = array<i64: 1, 128>}, {transform_indices = @transform_13, window_bounds = array<i64: 16, 8>}]} {
    %c0 = arith.constant 0 : index
    %c0_0 = arith.constant 0 : index
    %0 = vector.load %arg1[%c0, %c0_0] : memref<16x4xf32, #tpu.memory_space<vmem>>, vector<16x4xf32>
    %1 = arith.truncf %0 : vector<16x4xf32> to vector<16x4xbf16>
    %c0_1 = arith.constant 0 : index
    %c0_2 = arith.constant 0 : index
    %2 = vector.load %arg2[%c0_1, %c0_2] : memref<4x128xbf16, #tpu.memory_space<vmem>>, vector<4x128xbf16>
    %cst = arith.constant dense<0.000000e+00> : vector<16x128xf32>
    %3 = tpu.matmul %1, %2, %cst {dimension_numbers = #tpu.dot_dimension_numbers<[1], [0], [0], [1], [0, 0, 1, 1], [], []>} : vector<16x4xbf16>, vector<4x128xbf16>, vector<16x128xf32> -> vector<16x128xf32>
    %c0_3 = arith.constant 0 : index
    %c0_4 = arith.constant 0 : index
    %4 = vector.load %arg3[%c0_3, %c0_4] : memref<1x128xf32, #tpu.memory_space<vmem>>, vector<1x128xf32>
    %5 = vector.broadcast %4 : vector<1x128xf32> to vector<16x128xf32>
    %6 = arith.addf %3, %5 : vector<16x128xf32>
    %cst_5 = arith.constant 0.000000e+00 : f32
    %7 = vector.broadcast %cst_5 : f32 to vector<16x128xf32>
    %8 = arith.cmpf ogt, %6, %7 : vector<16x128xf32>
    %9 = math.exp %6 : vector<16x128xf32>
    %cst_6 = arith.constant 1.000000e+00 : f32
    %10 = vector.broadcast %cst_6 : f32 to vector<16x128xf32>
    %11 = arith.subf %9, %10 : vector<16x128xf32>
    %12 = arith.select %8, %6, %11 : vector<16x128xi1>, vector<16x128xf32>
    %13 = arith.truncf %12 : vector<16x128xf32> to vector<16x128xbf16>
    %c0_7 = arith.constant 0 : index
    %c0_8 = arith.constant 0 : index
    %14 = vector.load %arg4[%c0_7, %c0_8] : memref<128x128xbf16, #tpu.memory_space<vmem>>, vector<128x128xbf16>
    %cst_9 = arith.constant dense<0.000000e+00> : vector<16x128xf32>
    %15 = tpu.matmul %13, %14, %cst_9 {dimension_numbers = #tpu.dot_dimension_numbers<[1], [0], [0], [1], [0, 0, 1, 1], [], []>} : vector<16x128xbf16>, vector<128x128xbf16>, vector<16x128xf32> -> vector<16x128xf32>
    %c0_10 = arith.constant 0 : index
    %c0_11 = arith.constant 0 : index
    %16 = vector.load %arg5[%c0_10, %c0_11] : memref<1x128xf32, #tpu.memory_space<vmem>>, vector<1x128xf32>
    %17 = vector.broadcast %16 : vector<1x128xf32> to vector<16x128xf32>
    %18 = arith.addf %15, %17 : vector<16x128xf32>
    %cst_12 = arith.constant 0.000000e+00 : f32
    %19 = vector.broadcast %cst_12 : f32 to vector<16x128xf32>
    %20 = arith.cmpf ogt, %18, %19 : vector<16x128xf32>
    %21 = math.exp %18 : vector<16x128xf32>
    %cst_13 = arith.constant 1.000000e+00 : f32
    %22 = vector.broadcast %cst_13 : f32 to vector<16x128xf32>
    %23 = arith.subf %21, %22 : vector<16x128xf32>
    %24 = arith.select %20, %18, %23 : vector<16x128xi1>, vector<16x128xf32>
    %25 = arith.truncf %24 : vector<16x128xf32> to vector<16x128xbf16>
    %c0_14 = arith.constant 0 : index
    %c0_15 = arith.constant 0 : index
    %26 = vector.load %arg6[%c0_14, %c0_15] : memref<128x128xbf16, #tpu.memory_space<vmem>>, vector<128x128xbf16>
    %cst_16 = arith.constant dense<0.000000e+00> : vector<16x128xf32>
    %27 = tpu.matmul %25, %26, %cst_16 {dimension_numbers = #tpu.dot_dimension_numbers<[1], [0], [0], [1], [0, 0, 1, 1], [], []>} : vector<16x128xbf16>, vector<128x128xbf16>, vector<16x128xf32> -> vector<16x128xf32>
    %c0_17 = arith.constant 0 : index
    %c0_18 = arith.constant 0 : index
    %28 = vector.load %arg7[%c0_17, %c0_18] : memref<1x128xf32, #tpu.memory_space<vmem>>, vector<1x128xf32>
    %29 = vector.broadcast %28 : vector<1x128xf32> to vector<16x128xf32>
    %30 = arith.addf %27, %29 : vector<16x128xf32>
    %cst_19 = arith.constant 0.000000e+00 : f32
    %31 = vector.broadcast %cst_19 : f32 to vector<16x128xf32>
    %32 = arith.cmpf ogt, %30, %31 : vector<16x128xf32>
    %33 = math.exp %30 : vector<16x128xf32>
    %cst_20 = arith.constant 1.000000e+00 : f32
    %34 = vector.broadcast %cst_20 : f32 to vector<16x128xf32>
    %35 = arith.subf %33, %34 : vector<16x128xf32>
    %36 = arith.select %32, %30, %35 : vector<16x128xi1>, vector<16x128xf32>
    %37 = arith.truncf %36 : vector<16x128xf32> to vector<16x128xbf16>
    %c0_21 = arith.constant 0 : index
    %c0_22 = arith.constant 0 : index
    %38 = vector.load %arg8[%c0_21, %c0_22] : memref<128x256xbf16, #tpu.memory_space<vmem>>, vector<128x256xbf16>
    %cst_23 = arith.constant dense<0.000000e+00> : vector<16x256xf32>
    %39 = tpu.matmul %37, %38, %cst_23 {dimension_numbers = #tpu.dot_dimension_numbers<[1], [0], [0], [1], [0, 0, 1, 1], [], []>} : vector<16x128xbf16>, vector<128x256xbf16>, vector<16x256xf32> -> vector<16x256xf32>
    %c0_24 = arith.constant 0 : index
    %c0_25 = arith.constant 0 : index
    %40 = vector.load %arg9[%c0_24, %c0_25] : memref<1x256xf32, #tpu.memory_space<vmem>>, vector<1x256xf32>
    %41 = vector.broadcast %40 : vector<1x256xf32> to vector<16x256xf32>
    %42 = arith.addf %39, %41 : vector<16x256xf32>
    %cst_26 = arith.constant 0.000000e+00 : f32
    %43 = vector.broadcast %cst_26 : f32 to vector<16x256xf32>
    %44 = arith.cmpf ogt, %42, %43 : vector<16x256xf32>
    %45 = math.exp %42 : vector<16x256xf32>
    %cst_27 = arith.constant 1.000000e+00 : f32
    %46 = vector.broadcast %cst_27 : f32 to vector<16x256xf32>
    %47 = arith.subf %45, %46 : vector<16x256xf32>
    %48 = arith.select %44, %42, %47 : vector<16x256xi1>, vector<16x256xf32>
    %49 = arith.truncf %48 : vector<16x256xf32> to vector<16x256xbf16>
    %c0_28 = arith.constant 0 : index
    %c0_29 = arith.constant 0 : index
    %50 = vector.load %arg10[%c0_28, %c0_29] : memref<256x256xbf16, #tpu.memory_space<vmem>>, vector<256x256xbf16>
    %cst_30 = arith.constant dense<0.000000e+00> : vector<16x256xf32>
    %51 = tpu.matmul %49, %50, %cst_30 {dimension_numbers = #tpu.dot_dimension_numbers<[1], [0], [0], [1], [0, 0, 1, 1], [], []>} : vector<16x256xbf16>, vector<256x256xbf16>, vector<16x256xf32> -> vector<16x256xf32>
    %c0_31 = arith.constant 0 : index
    %c0_32 = arith.constant 0 : index
    %52 = vector.load %arg11[%c0_31, %c0_32] : memref<1x256xf32, #tpu.memory_space<vmem>>, vector<1x256xf32>
    %53 = vector.broadcast %52 : vector<1x256xf32> to vector<16x256xf32>
    %54 = arith.addf %51, %53 : vector<16x256xf32>
    %cst_33 = arith.constant 0.000000e+00 : f32
    %55 = vector.broadcast %cst_33 : f32 to vector<16x256xf32>
    %56 = arith.cmpf ogt, %54, %55 : vector<16x256xf32>
    %57 = math.exp %54 : vector<16x256xf32>
    %cst_34 = arith.constant 1.000000e+00 : f32
    %58 = vector.broadcast %cst_34 : f32 to vector<16x256xf32>
    %59 = arith.subf %57, %58 : vector<16x256xf32>
    %60 = arith.select %56, %54, %59 : vector<16x256xi1>, vector<16x256xf32>
    %61 = arith.truncf %60 : vector<16x256xf32> to vector<16x256xbf16>
    %c0_35 = arith.constant 0 : index
    %c0_36 = arith.constant 0 : index
    %62 = vector.load %arg12[%c0_35, %c0_36] : memref<256x128xbf16, #tpu.memory_space<vmem>>, vector<256x128xbf16>
    %cst_37 = arith.constant dense<0.000000e+00> : vector<16x128xf32>
    %63 = tpu.matmul %61, %62, %cst_37 {dimension_numbers = #tpu.dot_dimension_numbers<[1], [0], [0], [1], [0, 0, 1, 1], [], []>} : vector<16x256xbf16>, vector<256x128xbf16>, vector<16x128xf32> -> vector<16x128xf32>
    %c0_38 = arith.constant 0 : index
    %c0_39 = arith.constant 0 : index
    %64 = vector.load %arg13[%c0_38, %c0_39] : memref<1x128xf32, #tpu.memory_space<vmem>>, vector<1x128xf32>
    %65 = vector.broadcast %64 : vector<1x128xf32> to vector<16x128xf32>
    %66 = arith.addf %63, %65 : vector<16x128xf32>
    %67 = vector.extract_strided_slice %66 {offsets = [0, 0], sizes = [16, 8], strides = [1, 1]} : vector<16x128xf32> to vector<16x8xf32>
    %c0_40 = arith.constant 0 : index
    %c0_41 = arith.constant 0 : index
    %68 = vector.load %arg14[%c0_40, %c0_41] : memref<16x8xf32, #tpu.memory_space<vmem>>, vector<16x8xf32>
    tpu.vector_store %arg14[%c0_40, %c0_41], %67 {strides = array<i32>} : memref<16x8xf32, #tpu.memory_space<vmem>>, vector<16x8xf32>,
    return
  }
  func.func @transform_0(%arg0: i32) -> (i32, i32) {
    %c0_i32 = arith.constant 0 : i32
    %c0_i32_0 = arith.constant 0 : i32
    return %arg0, %c0_i32 : i32, i32
  }
  func.func @transform_1(%arg0: i32) -> (i32, i32) {
    %c0_i32 = arith.constant 0 : i32
    %c0_i32_0 = arith.constant 0 : i32
    %c0_i32_1 = arith.constant 0 : i32
    return %c0_i32, %c0_i32_0 : i32, i32
  }
  func.func @transform_2(%arg0: i32) -> (i32, i32) {
    %c0_i32 = arith.constant 0 : i32
    %c0_i32_0 = arith.constant 0 : i32
    %c0_i32_1 = arith.constant 0 : i32
    return %c0_i32, %c0_i32_0 : i32, i32
  }
  func.func @transform_3(%arg0: i32) -> (i32, i32) {
    %c0_i32 = arith.constant 0 : i32
    %c0_i32_0 = arith.constant 0 : i32
    %c0_i32_1 = arith.constant 0 : i32
    return %c0_i32, %c0_i32_0 : i32, i32
  }
  func.func @transform_4(%arg0: i32) -> (i32, i32) {
    %c0_i32 = arith.constant 0 : i32
    %c0_i32_0 = arith.constant 0 : i32
    %c0_i32_1 = arith.constant 0 : i32
    return %c0_i32, %c0_i32_0 : i32, i32
  }
  func.func @transform_5(%arg0: i32) -> (i32, i32) {
    %c0_i32 = arith.constant 0 : i32
    %c0_i32_0 = arith.constant 0 : i32
    %c0_i32_1 = arith.constant 0 : i32
    return %c0_i32, %c0_i32_0 : i32, i32
  }
  func.func @transform_6(%arg0: i32) -> (i32, i32) {
    %c0_i32 = arith.constant 0 : i32
    %c0_i32_0 = arith.constant 0 : i32
    %c0_i32_1 = arith.constant 0 : i32
    return %c0_i32, %c0_i32_0 : i32, i32
  }
  func.func @transform_7(%arg0: i32) -> (i32, i32) {
    %c0_i32 = arith.constant 0 : i32
    %c0_i32_0 = arith.constant 0 : i32
    %c0_i32_1 = arith.constant 0 : i32
    return %c0_i32, %c0_i32_0 : i32, i32
  }
  func.func @transform_8(%arg0: i32) -> (i32, i32) {
    %c0_i32 = arith.constant 0 : i32
    %c0_i32_0 = arith.constant 0 : i32
    %c0_i32_1 = arith.constant 0 : i32
    return %c0_i32, %c0_i32_0 : i32, i32
  }
  func.func @transform_9(%arg0: i32) -> (i32, i32) {
    %c0_i32 = arith.constant 0 : i32
    %c0_i32_0 = arith.constant 0 : i32
    %c0_i32_1 = arith.constant 0 : i32
    return %c0_i32, %c0_i32_0 : i32, i32
  }
  func.func @transform_10(%arg0: i32) -> (i32, i32) {
    %c0_i32 = arith.constant 0 : i32
    %c0_i32_0 = arith.constant 0 : i32
    %c0_i32_1 = arith.constant 0 : i32
    return %c0_i32, %c0_i32_0 : i32, i32
  }
  func.func @transform_11(%arg0: i32) -> (i32, i32) {
    %c0_i32 = arith.constant 0 : i32
    %c0_i32_0 = arith.constant 0 : i32
    %c0_i32_1 = arith.constant 0 : i32
    return %c0_i32, %c0_i32_0 : i32, i32
  }
  func.func @transform_12(%arg0: i32) -> (i32, i32) {
    %c0_i32 = arith.constant 0 : i32
    %c0_i32_0 = arith.constant 0 : i32
    %c0_i32_1 = arith.constant 0 : i32
    return %c0_i32, %c0_i32_0 : i32, i32
  }
  func.func @transform_13(%arg0: i32) -> (i32, i32) {
    %c0_i32 = arith.constant 0 : i32
    %c0_i32_0 = arith.constant 0 : i32
    return %arg0, %c0_i32 : i32, i32
  }
}

</mosaic_0001>

<llo_original>
// kernel: tpu_custom_call.1
$region0: #{tpu_custom_call.1}
  #allocation0 [shape = 'u32[]', space=smem, size = 0x4, offset = 0x4, fixed_abs, tag = 'smem constant byte address 0x4 - core index']
  #allocation1 [shape = 'u32[144,128]{1,0:T(1,128)}', space=vmem, size = 0x12000, scoped, tag = 'internal scratch']
  %s0 = inlined_call_operand.vmem [shape: f32[16,4], index: 0, kind: input, shape index: {}]
  %s1 = inlined_call_operand.vmem [shape: bf16[4,128], index: 1, kind: input, shape index: {}]
  %s2 = inlined_call_operand.vmem [shape: f32[1,128], index: 2, kind: input, shape index: {}]
  %s3 = inlined_call_operand.hbm [shape: bf16[128,128], index: 3, kind: input, shape index: {}]
  %s4 = inlined_call_operand.vmem [shape: f32[1,128], index: 4, kind: input, shape index: {}]
  %s5 = inlined_call_operand.hbm [shape: bf16[128,128], index: 5, kind: input, shape index: {}]
  %s6 = inlined_call_operand.vmem [shape: f32[1,128], index: 6, kind: input, shape index: {}]
  %s7 = inlined_call_operand.hbm [shape: bf16[128,256], index: 7, kind: input, shape index: {}]
  %s8 = inlined_call_operand.vmem [shape: f32[1,256], index: 8, kind: input, shape index: {}]
  %s9 = inlined_call_operand.hbm [shape: bf16[256,256], index: 9, kind: input, shape index: {}]
  %s10 = inlined_call_operand.vmem [shape: f32[1,256], index: 10, kind: input, shape index: {}]
  %s11 = inlined_call_operand.hbm [shape: bf16[256,128], index: 11, kind: input, shape index: {}]
  %s12 = inlined_call_operand.vmem [shape: f32[1,128], index: 12, kind: input, shape index: {}]
  %s13 = inlined_call_operand.vmem [shape: f32[16,8], index: 13, kind: output, shape index: {}]
  %s14 = sld [smem:[#allocation0]]
  $region82: #{tpu_custom_call.1} parent=0
    _
  %s16 = ssub.s32 1, %s14
  %s17 = scalar_select 0, %s16, %s14
  $region1: #{tpu_custom_call.1} parent=0
    #allocation2 [shape = 'u8[32768]{0}', space=vmem, size = 0x8000, scoped, tag = 'input window, operand 3, single buffered']
    #allocation3 [shape = 's32[1]{0}', space=sflag, size = 0x4, scoped, tag = 'scoped memory for tpu_custom_call.1']
    #allocation4 [shape = 'u8[32768]{0}', space=vmem, size = 0x8000, scoped, tag = 'input window, operand 5, single buffered']
    #allocation5 [shape = 's32[1]{0}', space=sflag, size = 0x4, scoped, tag = 'scoped memory for tpu_custom_call.1']
    #allocation6 [shape = 'u8[65536]{0}', space=vmem, size = 0x10000, scoped, tag = 'input window, operand 7, single buffered']
    #allocation7 [shape = 'u8[131072]{0}', space=vmem, size = 0x20000, scoped, tag = 'input window, operand 9, single buffered']
    #allocation8 [shape = 's32[1]{0}', space=sflag, size = 0x4, scoped, tag = 'scoped memory for tpu_custom_call.1']
    #allocation9 [shape = 'u8[65536]{0}', space=vmem, size = 0x10000, scoped, tag = 'input window, operand 11, single buffered']
    %18 = vsyncpa [#allocation3], 0
    %19 = vsyncpa [#allocation5], 0
    %20 = vsyncpa [#allocation8], 0
    // Predicated region
    $region2: #{tpu_custom_call.1} parent=1 // pred_check
      _
    $region3: #{tpu_custom_call.1} parent=1 // pred_check_branch
      %22 = sbr.rel (0) target = $region5
    $region4: #{tpu_custom_call.1} parent=1 // pred_region
      _
    $region5: #{tpu_custom_call.1} parent=1 // pred_fallthru
      _
    // Predicated region
    $region6: #{tpu_custom_call.1} parent=1 // pred_check
      _
    $region7: #{tpu_custom_call.1} parent=1 // pred_check_branch
      %24 = sbr.rel (0) target = $region9
    $region8: #{tpu_custom_call.1} parent=1 // pred_region
      _
    $region9: #{tpu_custom_call.1} parent=1 // pred_fallthru
      _
    // Predicated region
    $region10: #{tpu_custom_call.1} parent=1 // pred_check
      _
    $region11: #{tpu_custom_call.1} parent=1 // pred_check_branch
      %26 = sbr.rel (0) target = $region13
    $region12: #{tpu_custom_call.1} parent=1 // pred_region
      _
    $region13: #{tpu_custom_call.1} parent=1 // pred_fallthru
      _
    // Predicated region
    $region14: #{tpu_custom_call.1} parent=1 // pred_check
      _
    $region15: #{tpu_custom_call.1} parent=1 // pred_check_branch
      %28 = sbr.rel (0) target = $region17
    $region16: #{tpu_custom_call.1} parent=1 // pred_region
      %s30 = ssub.s32 1024, 1024
      %31 = vsyncadd [#allocation3], %s30
      %s32 = sshll.u32 [#allocation2], 4
      %s33 = int_to_ptr.vmem [resolvable:$true] %s32
      %38 = dma.hbm_to_vmem [thread:$0]  %s3, 1024, %s33, [#allocation3], 64, 64, 4
    $region17: #{tpu_custom_call.1} parent=1 // pred_fallthru
      _
    // Predicated region
    $region18: #{tpu_custom_call.1} parent=1 // pred_check
      _
    $region19: #{tpu_custom_call.1} parent=1 // pred_check_branch
      %40 = sbr.rel (0) target = $region21
    $region20: #{tpu_custom_call.1} parent=1 // pred_region
      _
    $region21: #{tpu_custom_call.1} parent=1 // pred_fallthru
      _
    // Predicated region
    $region22: #{tpu_custom_call.1} parent=1 // pred_check
      _
    $region23: #{tpu_custom_call.1} parent=1 // pred_check_branch
      %42 = sbr.rel (0) target = $region25
    $region24: #{tpu_custom_call.1} parent=1 // pred_region
      %s44 = ssub.s32 1024, 1024
      %45 = vsyncadd [#allocation5], %s44
      %s46 = sshll.u32 [#allocation4], 4
      %s47 = int_to_ptr.vmem [resolvable:$true] %s46
      %52 = dma.hbm_to_vmem [thread:$0]  %s5, 1024, %s47, [#allocation5], 64, 64, 4
    $region25: #{tpu_custom_call.1} parent=1 // pred_fallthru
      _
    // Predicated region
    $region26: #{tpu_custom_call.1} parent=1 // pred_check
      _
    $region27: #{tpu_custom_call.1} parent=1 // pred_check_branch
      %54 = sbr.rel (0) target = $region29
    $region28: #{tpu_custom_call.1} parent=1 // pred_region
      _
    $region29: #{tpu_custom_call.1} parent=1 // pred_fallthru
      _
    // Predicated region
    $region30: #{tpu_custom_call.1} parent=1 // pred_check
      _
    $region31: #{tpu_custom_call.1} parent=1 // pred_check_branch
      %56 = sbr.rel (0) target = $region33
    $region32: #{tpu_custom_call.1} parent=1 // pred_region
      %s58 = ssub.s32 2048, 2048
      %59 = vsyncadd [#allocation5], %s58
      %s60 = sshll.u32 [#allocation6], 4
      %s61 = int_to_ptr.vmem [resolvable:$true] %s60
      %66 = dma.hbm_to_vmem [thread:$0]  %s7, 2048, %s61, [#allocation5], 128, 128, 8
    $region33: #{tpu_custom_call.1} parent=1 // pred_fallthru
      _
    // Predicated region
    $region34: #{tpu_custom_call.1} parent=1 // pred_check
      _
    $region35: #{tpu_custom_call.1} parent=1 // pred_check_branch
      %68 = sbr.rel (0) target = $region37
    $region36: #{tpu_custom_call.1} parent=1 // pred_region
      _
    $region37: #{tpu_custom_call.1} parent=1 // pred_fallthru
      _
    // Predicated region
    $region38: #{tpu_custom_call.1} parent=1 // pred_check
      _
    $region39: #{tpu_custom_call.1} parent=1 // pred_check_branch
      %70 = sbr.rel (0) target = $region41
    $region40: #{tpu_custom_call.1} parent=1 // pred_region
      %s72 = ssub.s32 4096, 4096
      %73 = vsyncadd [#allocation8], %s72
      %s74 = sshll.u32 [#allocation7], 4
      %s75 = int_to_ptr.vmem [resolvable:$true] %s74
      %80 = dma.hbm_to_vmem [thread:$0]  %s9, 4096, %s75, [#allocation8], 128, 128, 8
    $region41: #{tpu_custom_call.1} parent=1 // pred_fallthru
      _
    // Predicated region
    $region42: #{tpu_custom_call.1} parent=1 // pred_check
      _
    $region43: #{tpu_custom_call.1} parent=1 // pred_check_branch
      %82 = sbr.rel (0) target = $region45
    $region44: #{tpu_custom_call.1} parent=1 // pred_region
      _
    $region45: #{tpu_custom_call.1} parent=1 // pred_fallthru
      _
    // Predicated region
    $region46: #{tpu_custom_call.1} parent=1 // pred_check
      _
    $region47: #{tpu_custom_call.1} parent=1 // pred_check_branch
      %84 = sbr.rel (0) target = $region49
    $region48: #{tpu_custom_call.1} parent=1 // pred_region
      %s86 = ssub.s32 2048, 2048
      %87 = vsyncadd [#allocation8], %s86
      %s88 = sshll.u32 [#allocation9], 4
      %s89 = int_to_ptr.vmem [resolvable:$true] %s88
      %94 = dma.hbm_to_vmem [thread:$0]  %s11, 2048, %s89, [#allocation8], 64, 64, 4
    $region49: #{tpu_custom_call.1} parent=1 // pred_fallthru
      _
    // Predicated region
    $region50: #{tpu_custom_call.1} parent=1 // pred_check
      _
    $region51: #{tpu_custom_call.1} parent=1 // pred_check_branch
      %96 = sbr.rel (0) target = $region53
    $region52: #{tpu_custom_call.1} parent=1 // pred_region
      _
    $region53: #{tpu_custom_call.1} parent=1 // pred_fallthru
      _
    // Predicated region
    $region54: #{tpu_custom_call.1} parent=1 // pred_check
      _
    $region55: #{tpu_custom_call.1} parent=1 // pred_check_branch
      %98 = sbr.rel (0) target = $region57
    $region56: #{tpu_custom_call.1} parent=1 // pred_region
      %99 = dma.done [#allocation3], 1024
    $region57: #{tpu_custom_call.1} parent=1 // pred_fallthru
      _
    // Predicated region
    $region58: #{tpu_custom_call.1} parent=1 // pred_check
      _
    $region59: #{tpu_custom_call.1} parent=1 // pred_check_branch
      %101 = sbr.rel (0) target = $region61
    $region60: #{tpu_custom_call.1} parent=1 // pred_region
      %102 = dma.done [#allocation5], 1024
    $region61: #{tpu_custom_call.1} parent=1 // pred_fallthru
      _
    // Predicated region
    $region62: #{tpu_custom_call.1} parent=1 // pred_check
      _
    $region63: #{tpu_custom_call.1} parent=1 // pred_check_branch
      %104 = sbr.rel (0) target = $region65
    $region64: #{tpu_custom_call.1} parent=1 // pred_region
      %105 = dma.done [#allocation5], 2048
    $region65: #{tpu_custom_call.1} parent=1 // pred_fallthru
      _
    // Predicated region
    $region66: #{tpu_custom_call.1} parent=1 // pred_check
      _
    $region67: #{tpu_custom_call.1} parent=1 // pred_check_branch
      %107 = sbr.rel (0) target = $region69
    $region68: #{tpu_custom_call.1} parent=1 // pred_region
      %108 = dma.done [#allocation8], 4096
    $region69: #{tpu_custom_call.1} parent=1 // pred_fallthru
      _
    // Predicated region
    $region70: #{tpu_custom_call.1} parent=1 // pred_check
      _
    $region71: #{tpu_custom_call.1} parent=1 // pred_check_branch
      %110 = sbr.rel (0) target = $region73
    $region72: #{tpu_custom_call.1} parent=1 // pred_region
      %111 = dma.done [#allocation8], 2048
    $region73: #{tpu_custom_call.1} parent=1 // pred_fallthru
      _
    %v113 = vld [vmem:[%s0] sm:$0xff]
    %v114 = vld [vmem:[%s0 + $0x8] sm:$0xff]
    %v115 = vpack.c.bf16 %v114, %v113
    %v116 = vld [vmem:[%s1] sm:$0x3]
    %v117 = vld [vmem:[%s2] sm:$0x1]
    %v119 = vlaneseq
    %v120 = vshrl.u32 %v119, 7
    %v121 = vsub.s32 0, %v120
    %v122 = vrot.slane %v117, %v121
    %vm124 = vcmask 31744
    %v126 = vsel %vm124, %v115, 0
    %vm128 = vcmask 1041408
    %v130 = vsel %vm128, %v116, 0
    %132 = vmatprep.subr.bf16.mxu0 0
    %133 = vmatpush1.bf16.msra.mxu0 %v130
    %134 = vmatprep.subr.bf16.mxu0 0
    %135 = vmatpush1.bf16.msra.mxu0 0
    %136 = vmatprep.subr.bf16.mxu0 0
    %137 = vmatpush1.bf16.msra.mxu0 0
    %138 = vmatprep.subr.bf16.mxu0 0
    %139 = vmatpush1.bf16.msra.mxu0 0
    %140 = vmatprep.subr.bf16.mxu0 0
    %141 = vmatpush1.bf16.msra.mxu0 0
    %142 = vmatprep.subr.bf16.mxu0 0
    %143 = vmatpush1.bf16.msra.mxu0 0
    %144 = vmatprep.subr.bf16.mxu0 0
    %145 = vmatpush1.bf16.msra.mxu0 0
    %146 = vmatprep.subr.bf16.mxu0 0
    %147 = vmatpush1.bf16.msra.mxu0 0
    %148 = vmatprep.subr.bf16.mxu0 0
    %149 = vmatpush1.bf16.msra.mxu0 0
    %150 = vmatprep.subr.bf16.mxu0 0
    %151 = vmatpush1.bf16.msra.mxu0 0
    %152 = vmatprep.subr.bf16.mxu0 0
    %153 = vmatpush1.bf16.msra.mxu0 0
    %154 = vmatprep.subr.bf16.mxu0 0
    %155 = vmatpush1.bf16.msra.mxu0 0
    %156 = vmatprep.subr.bf16.mxu0 0
    %157 = vmatpush1.bf16.msra.mxu0 0
    %158 = vmatprep.subr.bf16.mxu0 0
    %159 = vmatpush1.bf16.msra.mxu0 0
    %160 = vmatprep.subr.bf16.mxu0 0
    %161 = vmatpush1.bf16.msra.mxu0 0
    %162 = vmatprep.subr.bf16.mxu0 0
    %163 = vmatpush1.bf16.msra.mxu0 0
    %164 = vmatprep.mubr.bf16.mxu0 0
    %165 = vmatmul.mubr.bf16.gmra.mrb[0].mxu0 %v126
    %v166 = vpop.f32.mrb[0].mxu0
    %v167 = vadd.f32 %v122, %v166
    %v168 = vpop.f32.mrb[0].mxu0
    %v169 = vpop.f32.mrb[0].mxu0
    %v170 = vadd.f32 %v122, %v169
    %v171 = vpop.f32.mrb[0].mxu0
    %172 = vdwg.mxu0
    %vm173 = vcmp.gt.f32.partialorder %v167, 0.0
    %vm174 = vcmp.gt.f32.partialorder %v170, 0.0
    %v175 = vmul.f32 %v167, 1.442695
    %v176 = vpow.pop %v175
    %v177 = vmul.f32 %v170, 1.442695
    %v178 = vpow.pop %v177
    %v179 = vsub.f32 %v176, 1.0
    %v180 = vsub.f32 %v178, 1.0
    %v181 = vsel %vm173, %v167, %v179
    %v182 = vsel %vm174, %v170, %v180
    %v183 = vpack.c.bf16 %v182, %v181
    %v184 = vld [vmem:[#allocation2] sm:$0xf]
    %v185 = vld [vmem:[#allocation2 + $0x4] sm:$0xf]
    %v186 = vld [vmem:[#allocation2 + $0x8] sm:$0xf]
    %v187 = vld [vmem:[#allocation2 + $0xc] sm:$0xf]
    %v188 = vld [vmem:[#allocation2 + $0x10] sm:$0xf]
    %v189 = vld [vmem:[#allocation2 + $0x14] sm:$0xf]
    %v190 = vld [vmem:[#allocation2 + $0x18] sm:$0xf]
    %v191 = vld [vmem:[#allocation2 + $0x1c] sm:$0xf]
    %v192 = vld [vmem:[#allocation2 + $0x20] sm:$0xf]
    %v193 = vld [vmem:[#allocation2 + $0x24] sm:$0xf]
    %v194 = vld [vmem:[#allocation2 + $0x28] sm:$0xf]
    %v195 = vld [vmem:[#allocation2 + $0x2c] sm:$0xf]
    %v196 = vld [vmem:[#allocation2 + $0x30] sm:$0xf]
    %v197 = vld [vmem:[#allocation2 + $0x34] sm:$0xf]
    %v198 = vld [vmem:[#allocation2 + $0x38] sm:$0xf]
    %v199 = vld [vmem:[#allocation2 + $0x3c] sm:$0xf]
    %v200 = vld [vmem:[%s4] sm:$0x1]
    %v202 = vlaneseq
    %v203 = vshrl.u32 %v202, 7
    %v204 = vsub.s32 0, %v203
    %v205 = vrot.slane %v200, %v204
    %v223 = vunpack.c.l.b16 %v184
    %v224 = vunpack.c.l.b16 %v185
    %v225 = vunpack.c.l.b16 %v186
    %v226 = vunpack.c.l.b16 %v187
    %v227 = vunpack.c.l.b16 %v188
    %v228 = vunpack.c.l.b16 %v189
    %v229 = vunpack.c.l.b16 %v190
    %v230 = vunpack.c.l.b16 %v191
    %v231 = vunpack.c.l.b16 %v192
    %v232 = vunpack.c.l.b16 %v193
    %v233 = vunpack.c.l.b16 %v194
    %v234 = vunpack.c.l.b16 %v195
    %v235 = vunpack.c.l.b16 %v196
    %v236 = vunpack.c.l.b16 %v197
    %v237 = vunpack.c.l.b16 %v198
    %v238 = vunpack.c.l.b16 %v199
    %v239 = vpack.c.b16 %v224, %v223
    %v240 = vpack.c.b16 %v226, %v225
    %v241 = vpack.c.b16 %v228, %v227
    %v242 = vpack.c.b16 %v230, %v229
    %v243 = vpack.c.b16 %v232, %v231
    %v244 = vpack.c.b16 %v234, %v233
    %v245 = vpack.c.b16 %v236, %v235
    %v246 = vpack.c.b16 %v238, %v237
    %255 = vmatprep.subr.bf16.mxu0 0
    %256 = vmatpush1.bf16.msra.mxu0 %v239
    %257 = vmatprep.subr.bf16.mxu0 0
    %258 = vmatpush1.bf16.msra.mxu0 %v240
    %259 = vmatprep.subr.bf16.mxu0 0
    %260 = vmatpush1.bf16.msra.mxu0 %v241
    %261 = vmatprep.subr.bf16.mxu0 0
    %262 = vmatpush1.bf16.msra.mxu0 %v242
    %263 = vmatprep.subr.bf16.mxu0 0
    %264 = vmatpush1.bf16.msra.mxu0 %v243
    %265 = vmatprep.subr.bf16.mxu0 0
    %266 = vmatpush1.bf16.msra.mxu0 %v244
    %267 = vmatprep.subr.bf16.mxu0 0
    %268 = vmatpush1.bf16.msra.mxu0 %v245
    %269 = vmatprep.subr.bf16.mxu0 0
    %270 = vmatpush1.bf16.msra.mxu0 %v246
    %271 = vmatprep.subr.bf16.mxu0 0
    %272 = vmatpush1.bf16.msra.mxu0 0
    %273 = vmatprep.subr.bf16.mxu0 0
    %274 = vmatpush1.bf16.msra.mxu0 0
    %275 = vmatprep.subr.bf16.mxu0 0
    %276 = vmatpush1.bf16.msra.mxu0 0
    %277 = vmatprep.subr.bf16.mxu0 0
    %278 = vmatpush1.bf16.msra.mxu0 0
    %279 = vmatprep.subr.bf16.mxu0 0
    %280 = vmatpush1.bf16.msra.mxu0 0
    %281 = vmatprep.subr.bf16.mxu0 0
    %282 = vmatpush1.bf16.msra.mxu0 0
    %283 = vmatprep.subr.bf16.mxu0 0
    %284 = vmatpush1.bf16.msra.mxu0 0
    %285 = vmatprep.subr.bf16.mxu0 0
    %286 = vmatpush1.bf16.msra.mxu0 0
    %287 = vmatprep.mubr.bf16.mxu0 0
    %288 = vmatmul.mubr.bf16.gmra.mrb[0].mxu0 %v183
    %v289 = vpop.f32.mrb[0].mxu0
    %v290 = vadd.f32 %v205, %v289
    %v291 = vpop.f32.mrb[0].mxu0
    %v292 = vpop.f32.mrb[0].mxu0
    %v293 = vadd.f32 %v205, %v292
    %v294 = vpop.f32.mrb[0].mxu0
    %295 = vdwg.mxu0
    %vm296 = vcmp.gt.f32.partialorder %v290, 0.0
    %vm297 = vcmp.gt.f32.partialorder %v293, 0.0
    %v298 = vmul.f32 %v290, 1.442695
    %v299 = vpow.pop %v298
    %v300 = vmul.f32 %v293, 1.442695
    %v301 = vpow.pop %v300
    %v302 = vsub.f32 %v299, 1.0
    %v303 = vsub.f32 %v301, 1.0
    %v304 = vsel %vm296, %v290, %v302
    %v305 = vsel %vm297, %v293, %v303
    %v306 = vpack.c.bf16 %v305, %v304
    %v307 = vld [vmem:[#allocation4] sm:$0xf]
    %v308 = vld [vmem:[#allocation4 + $0x4] sm:$0xf]
    %v309 = vld [vmem:[#allocation4 + $0x8] sm:$0xf]
    %v310 = vld [vmem:[#allocation4 + $0xc] sm:$0xf]
    %v311 = vld [vmem:[#allocation4 + $0x10] sm:$0xf]
    %v312 = vld [vmem:[#allocation4 + $0x14] sm:$0xf]
    %v313 = vld [vmem:[#allocation4 + $0x18] sm:$0xf]
    %v314 = vld [vmem:[#allocation4 + $0x1c] sm:$0xf]
    %v315 = vld [vmem:[#allocation4 + $0x20] sm:$0xf]
    %v316 = vld [vmem:[#allocation4 + $0x24] sm:$0xf]
    %v317 = vld [vmem:[#allocation4 + $0x28] sm:$0xf]
    %v318 = vld [vmem:[#allocation4 + $0x2c] sm:$0xf]
    %v319 = vld [vmem:[#allocation4 + $0x30] sm:$0xf]
    %v320 = vld [vmem:[#allocation4 + $0x34] sm:$0xf]
    %v321 = vld [vmem:[#allocation4 + $0x38] sm:$0xf]
    %v322 = vld [vmem:[#allocation4 + $0x3c] sm:$0xf]
    %v323 = vld [vmem:[%s6] sm:$0x1]
    %v325 = vlaneseq
    %v326 = vshrl.u32 %v325, 7
    %v327 = vsub.s32 0, %v326
    %v328 = vrot.slane %v323, %v327
    %v346 = vunpack.c.l.b16 %v307
    %v347 = vunpack.c.l.b16 %v308
    %v348 = vunpack.c.l.b16 %v309
    %v349 = vunpack.c.l.b16 %v310
    %v350 = vunpack.c.l.b16 %v311
    %v351 = vunpack.c.l.b16 %v312
    %v352 = vunpack.c.l.b16 %v313
    %v353 = vunpack.c.l.b16 %v314
    %v354 = vunpack.c.l.b16 %v315
    %v355 = vunpack.c.l.b16 %v316
    %v356 = vunpack.c.l.b16 %v317
    %v357 = vunpack.c.l.b16 %v318
    %v358 = vunpack.c.l.b16 %v319
    %v359 = vunpack.c.l.b16 %v320
    %v360 = vunpack.c.l.b16 %v321
    %v361 = vunpack.c.l.b16 %v322
    %v362 = vpack.c.b16 %v347, %v346
    %v363 = vpack.c.b16 %v349, %v348
    %v364 = vpack.c.b16 %v351, %v350
    %v365 = vpack.c.b16 %v353, %v352
    %v366 = vpack.c.b16 %v355, %v354
    %v367 = vpack.c.b16 %v357, %v356
    %v368 = vpack.c.b16 %v359, %v358
    %v369 = vpack.c.b16 %v361, %v360
    %378 = vmatprep.subr.bf16.mxu0 0
    %379 = vmatpush1.bf16.msra.mxu0 %v362
    %380 = vmatprep.subr.bf16.mxu0 0
    %381 = vmatpush1.bf16.msra.mxu0 %v363
    %382 = vmatprep.subr.bf16.mxu0 0
    %383 = vmatpush1.bf16.msra.mxu0 %v364
    %384 = vmatprep.subr.bf16.mxu0 0
    %385 = vmatpush1.bf16.msra.mxu0 %v365
    %386 = vmatprep.subr.bf16.mxu0 0
    %387 = vmatpush1.bf16.msra.mxu0 %v366
    %388 = vmatprep.subr.bf16.mxu0 0
    %389 = vmatpush1.bf16.msra.mxu0 %v367
    %390 = vmatprep.subr.bf16.mxu0 0
    %391 = vmatpush1.bf16.msra.mxu0 %v368
    %392 = vmatprep.subr.bf16.mxu0 0
    %393 = vmatpush1.bf16.msra.mxu0 %v369
    %394 = vmatprep.subr.bf16.mxu0 0
    %395 = vmatpush1.bf16.msra.mxu0 0
    %396 = vmatprep.subr.bf16.mxu0 0
    %397 = vmatpush1.bf16.msra.mxu0 0
    %398 = vmatprep.subr.bf16.mxu0 0
    %399 = vmatpush1.bf16.msra.mxu0 0
    %400 = vmatprep.subr.bf16.mxu0 0
    %401 = vmatpush1.bf16.msra.mxu0 0
    %402 = vmatprep.subr.bf16.mxu0 0
    %403 = vmatpush1.bf16.msra.mxu0 0
    %404 = vmatprep.subr.bf16.mxu0 0
    %405 = vmatpush1.bf16.msra.mxu0 0
    %406 = vmatprep.subr.bf16.mxu0 0
    %407 = vmatpush1.bf16.msra.mxu0 0
    %408 = vmatprep.subr.bf16.mxu0 0
    %409 = vmatpush1.bf16.msra.mxu0 0
    %410 = vmatprep.mubr.bf16.mxu0 0
    %411 = vmatmul.mubr.bf16.gmra.mrb[0].mxu0 %v306
    %v412 = vpop.f32.mrb[0].mxu0
    %v413 = vadd.f32 %v328, %v412
    %v414 = vpop.f32.mrb[0].mxu0
    %v415 = vpop.f32.mrb[0].mxu0
    %v416 = vadd.f32 %v328, %v415
    %v417 = vpop.f32.mrb[0].mxu0
    %418 = vdwg.mxu0
    %vm419 = vcmp.gt.f32.partialorder %v413, 0.0
    %vm420 = vcmp.gt.f32.partialorder %v416, 0.0
    %v421 = vmul.f32 %v413, 1.442695
    %v422 = vpow.pop %v421
    %v423 = vmul.f32 %v416, 1.442695
    %v424 = vpow.pop %v423
    %v425 = vsub.f32 %v422, 1.0
    %v426 = vsub.f32 %v424, 1.0
    %v427 = vsel %vm419, %v413, %v425
    %v428 = vsel %vm420, %v416, %v426
    %v429 = vpack.c.bf16 %v428, %v427
    %v430 = vld [vmem:[#allocation6] sm:$0xff]
    %v431 = vld [vmem:[#allocation6 + $0x8] sm:$0xff]
    %v432 = vld [vmem:[#allocation6 + $0x10] sm:$0xff]
    %v433 = vld [vmem:[#allocation6 + $0x18] sm:$0xff]
    %v434 = vld [vmem:[#allocation6 + $0x20] sm:$0xff]
    %v435 = vld [vmem:[#allocation6 + $0x28] sm:$0xff]
    %v436 = vld [vmem:[#allocation6 + $0x30] sm:$0xff]
    %v437 = vld [vmem:[#allocation6 + $0x38] sm:$0xff]
    %v438 = vld [vmem:[#allocation6 + $0x40] sm:$0xff]
    %v439 = vld [vmem:[#allocation6 + $0x48] sm:$0xff]
    %v440 = vld [vmem:[#allocation6 + $0x50] sm:$0xff]
    %v441 = vld [vmem:[#allocation6 + $0x58] sm:$0xff]
    %v442 = vld [vmem:[#allocation6 + $0x60] sm:$0xff]
    %v443 = vld [vmem:[#allocation6 + $0x68] sm:$0xff]
    %v444 = vld [vmem:[#allocation6 + $0x70] sm:$0xff]
    %v445 = vld [vmem:[#allocation6 + $0x78] sm:$0xff]
    %v446 = vld [vmem:[%s8] sm:$0x3]
    %v448 = vlaneseq
    %v449 = vshrl.u32 %v448, 7
    %v450 = vsub.s32 0, %v449
    %v451 = vrot.slane %v446, %v450
    %v452 = vlaneseq
    %v453 = vshrl.u32 %v452, 7
    %v454 = vsub.s32 1, %v453
    %v455 = vrot.slane %v446, %v454
    %v474 = vunpack.c.l.b16 %v430
    %v475 = vunpack.c.h.b16 %v430
    %v476 = vunpack.c.l.b16 %v431
    %v477 = vunpack.c.h.b16 %v431
    %v478 = vunpack.c.l.b16 %v432
    %v479 = vunpack.c.h.b16 %v432
    %v480 = vunpack.c.l.b16 %v433
    %v481 = vunpack.c.h.b16 %v433
    %v482 = vunpack.c.l.b16 %v434
    %v483 = vunpack.c.h.b16 %v434
    %v484 = vunpack.c.l.b16 %v435
    %v485 = vunpack.c.h.b16 %v435
    %v486 = vunpack.c.l.b16 %v436
    %v487 = vunpack.c.h.b16 %v436
    %v488 = vunpack.c.l.b16 %v437
    %v489 = vunpack.c.h.b16 %v437
    %v490 = vunpack.c.l.b16 %v438
    %v491 = vunpack.c.h.b16 %v438
    %v492 = vunpack.c.l.b16 %v439
    %v493 = vunpack.c.h.b16 %v439
    %v494 = vunpack.c.l.b16 %v440
    %v495 = vunpack.c.h.b16 %v440
    %v496 = vunpack.c.l.b16 %v441
    %v497 = vunpack.c.h.b16 %v441
    %v498 = vunpack.c.l.b16 %v442
    %v499 = vunpack.c.h.b16 %v442
    %v500 = vunpack.c.l.b16 %v443
    %v501 = vunpack.c.h.b16 %v443
    %v502 = vunpack.c.l.b16 %v444
    %v503 = vunpack.c.h.b16 %v444
    %v504 = vunpack.c.l.b16 %v445
    %v505 = vunpack.c.h.b16 %v445
    %v506 = vpack.c.b16 %v476, %v474
    %v507 = vpack.c.b16 %v477, %v475
    %v508 = vpack.c.b16 %v480, %v478
    %v509 = vpack.c.b16 %v481, %v479
    %v510 = vpack.c.b16 %v484, %v482
    %v511 = vpack.c.b16 %v485, %v483
    %v512 = vpack.c.b16 %v488, %v486
    %v513 = vpack.c.b16 %v489, %v487
    %v514 = vpack.c.b16 %v492, %v490
    %v515 = vpack.c.b16 %v493, %v491
    %v516 = vpack.c.b16 %v496, %v494
    %v517 = vpack.c.b16 %v497, %v495
    %v518 = vpack.c.b16 %v500, %v498
    %v519 = vpack.c.b16 %v501, %v499
    %v520 = vpack.c.b16 %v504, %v502
    %v521 = vpack.c.b16 %v505, %v503
    %538 = vmatprep.subr.bf16.mxu0 %v507
    %539 = vmatpush1.bf16.msra.mxu0 %v506
    %540 = vmatprep.subr.bf16.mxu0 %v509
    %541 = vmatpush1.bf16.msra.mxu0 %v508
    %542 = vmatprep.subr.bf16.mxu0 %v511
    %543 = vmatpush1.bf16.msra.mxu0 %v510
    %544 = vmatprep.subr.bf16.mxu0 %v513
    %545 = vmatpush1.bf16.msra.mxu0 %v512
    %546 = vmatprep.subr.bf16.mxu0 %v515
    %547 = vmatpush1.bf16.msra.mxu0 %v514
    %548 = vmatprep.subr.bf16.mxu0 %v517
    %549 = vmatpush1.bf16.msra.mxu0 %v516
    %550 = vmatprep.subr.bf16.mxu0 %v519
    %551 = vmatpush1.bf16.msra.mxu0 %v518
    %552 = vmatprep.subr.bf16.mxu0 %v521
    %553 = vmatpush1.bf16.msra.mxu0 %v520
    %554 = vmatprep.subr.bf16.mxu0 0
    %555 = vmatpush1.bf16.msra.mxu0 0
    %556 = vmatprep.subr.bf16.mxu0 0
    %557 = vmatpush1.bf16.msra.mxu0 0
    %558 = vmatprep.subr.bf16.mxu0 0
    %559 = vmatpush1.bf16.msra.mxu0 0
    %560 = vmatprep.subr.bf16.mxu0 0
    %561 = vmatpush1.bf16.msra.mxu0 0
    %562 = vmatprep.subr.bf16.mxu0 0
    %563 = vmatpush1.bf16.msra.mxu0 0
    %564 = vmatprep.subr.bf16.mxu0 0
    %565 = vmatpush1.bf16.msra.mxu0 0
    %566 = vmatprep.subr.bf16.mxu0 0
    %567 = vmatpush1.bf16.msra.mxu0 0
    %568 = vmatprep.subr.bf16.mxu0 0
    %569 = vmatpush1.bf16.msra.mxu0 0
    %570 = vmatprep.mubr.bf16.mxu0 0
    %571 = vmatmul.mubr.bf16.gmra.mrb[0].mxu0 %v429
    %v572 = vpop.f32.mrb[0].mxu0
    %v573 = vadd.f32 %v451, %v572
    %v574 = vpop.f32.mrb[0].mxu0
    %v575 = vadd.f32 %v455, %v574
    %v576 = vpop.f32.mrb[0].mxu0
    %v577 = vadd.f32 %v451, %v576
    %v578 = vpop.f32.mrb[0].mxu0
    %v579 = vadd.f32 %v455, %v578
    %580 = vdwg.mxu0
    %vm581 = vcmp.gt.f32.partialorder %v573, 0.0
    %vm582 = vcmp.gt.f32.partialorder %v575, 0.0
    %vm583 = vcmp.gt.f32.partialorder %v577, 0.0
    %vm584 = vcmp.gt.f32.partialorder %v579, 0.0
    %v585 = vmul.f32 %v573, 1.442695
    %v586 = vpow.pop %v585
    %v587 = vmul.f32 %v575, 1.442695
    %v588 = vpow.pop %v587
    %v589 = vmul.f32 %v577, 1.442695
    %v590 = vpow.pop %v589
    %v591 = vmul.f32 %v579, 1.442695
    %v592 = vpow.pop %v591
    %v593 = vsub.f32 %v586, 1.0
    %v594 = vsub.f32 %v588, 1.0
    %v595 = vsub.f32 %v590, 1.0
    %v596 = vsub.f32 %v592, 1.0
    %v597 = vsel %vm581, %v573, %v593
    %v598 = vsel %vm582, %v575, %v594
    %v599 = vsel %vm583, %v577, %v595
    %v600 = vsel %vm584, %v579, %v596
    %v601 = vpack.c.bf16 %v599, %v597
    %v602 = vpack.c.bf16 %v600, %v598
    %v603 = vld [vmem:[#allocation7] sm:$0xff]
    %v604 = vld [vmem:[#allocation7 + $0x8] sm:$0xff]
    %v605 = vld [vmem:[#allocation7 + $0x10] sm:$0xff]
    %v606 = vld [vmem:[#allocation7 + $0x18] sm:$0xff]
    %v607 = vld [vmem:[#allocation7 + $0x20] sm:$0xff]
    %v608 = vld [vmem:[#allocation7 + $0x28] sm:$0xff]
    %v609 = vld [vmem:[#allocation7 + $0x30] sm:$0xff]
    %v610 = vld [vmem:[#allocation7 + $0x38] sm:$0xff]
    %v611 = vld [vmem:[#allocation7 + $0x40] sm:$0xff]
    %v612 = vld [vmem:[#allocation7 + $0x48] sm:$0xff]
    %v613 = vld [vmem:[#allocation7 + $0x50] sm:$0xff]
    %v614 = vld [vmem:[#allocation7 + $0x58] sm:$0xff]
    %v615 = vld [vmem:[#allocation7 + $0x60] sm:$0xff]
    %v616 = vld [vmem:[#allocation7 + $0x68] sm:$0xff]
    %v617 = vld [vmem:[#allocation7 + $0x70] sm:$0xff]
    %v618 = vld [vmem:[#allocation7 + $0x78] sm:$0xff]
    %v619 = vld [vmem:[#allocation7 + $0x80] sm:$0xff]
    %v620 = vld [vmem:[#allocation7 + $0x88] sm:$0xff]
    %v621 = vld [vmem:[#allocation7 + $0x90] sm:$0xff]
    %v622 = vld [vmem:[#allocation7 + $0x98] sm:$0xff]
    %v623 = vld [vmem:[#allocation7 + $0xa0] sm:$0xff]
    %v624 = vld [vmem:[#allocation7 + $0xa8] sm:$0xff]
    %v625 = vld [vmem:[#allocation7 + $0xb0] sm:$0xff]
    %v626 = vld [vmem:[#allocation7 + $0xb8] sm:$0xff]
    %v627 = vld [vmem:[#allocation7 + $0xc0] sm:$0xff]
    %v628 = vld [vmem:[#allocation7 + $0xc8] sm:$0xff]
    %v629 = vld [vmem:[#allocation7 + $0xd0] sm:$0xff]
    %v630 = vld [vmem:[#allocation7 + $0xd8] sm:$0xff]
    %v631 = vld [vmem:[#allocation7 + $0xe0] sm:$0xff]
    %v632 = vld [vmem:[#allocation7 + $0xe8] sm:$0xff]
    %v633 = vld [vmem:[#allocation7 + $0xf0] sm:$0xff]
    %v634 = vld [vmem:[#allocation7 + $0xf8] sm:$0xff]
    %v635 = vld [vmem:[%s10] sm:$0x3]
    %v637 = vlaneseq
    %v638 = vshrl.u32 %v637, 7
    %v639 = vsub.s32 0, %v638
    %v640 = vrot.slane %v635, %v639
    %v641 = vlaneseq
    %v642 = vshrl.u32 %v641, 7
    %v643 = vsub.s32 1, %v642
    %v644 = vrot.slane %v635, %v643
    %v679 = vunpack.c.l.b16 %v603
    %v680 = vunpack.c.h.b16 %v603
    %v681 = vunpack.c.l.b16 %v604
    %v682 = vunpack.c.h.b16 %v604
    %v683 = vunpack.c.l.b16 %v605
    %v684 = vunpack.c.h.b16 %v605
    %v685 = vunpack.c.l.b16 %v606
    %v686 = vunpack.c.h.b16 %v606
    %v687 = vunpack.c.l.b16 %v607
    %v688 = vunpack.c.h.b16 %v607
    %v689 = vunpack.c.l.b16 %v608
    %v690 = vunpack.c.h.b16 %v608
    %v691 = vunpack.c.l.b16 %v609
    %v692 = vunpack.c.h.b16 %v609
    %v693 = vunpack.c.l.b16 %v610
    %v694 = vunpack.c.h.b16 %v610
    %v695 = vunpack.c.l.b16 %v611
    %v696 = vunpack.c.h.b16 %v611
    %v697 = vunpack.c.l.b16 %v612
    %v698 = vunpack.c.h.b16 %v612
    %v699 = vunpack.c.l.b16 %v613
    %v700 = vunpack.c.h.b16 %v613
    %v701 = vunpack.c.l.b16 %v614
    %v702 = vunpack.c.h.b16 %v614
    %v703 = vunpack.c.l.b16 %v615
    %v704 = vunpack.c.h.b16 %v615
    %v705 = vunpack.c.l.b16 %v616
    %v706 = vunpack.c.h.b16 %v616
    %v707 = vunpack.c.l.b16 %v617
    %v708 = vunpack.c.h.b16 %v617
    %v709 = vunpack.c.l.b16 %v618
    %v710 = vunpack.c.h.b16 %v618
    %v711 = vunpack.c.l.b16 %v619
    %v712 = vunpack.c.h.b16 %v619
    %v713 = vunpack.c.l.b16 %v620
    %v714 = vunpack.c.h.b16 %v620
    %v715 = vunpack.c.l.b16 %v621
    %v716 = vunpack.c.h.b16 %v621
    %v717 = vunpack.c.l.b16 %v622
    %v718 = vunpack.c.h.b16 %v622
    %v719 = vunpack.c.l.b16 %v623
    %v720 = vunpack.c.h.b16 %v623
    %v721 = vunpack.c.l.b16 %v624
    %v722 = vunpack.c.h.b16 %v624
    %v723 = vunpack.c.l.b16 %v625
    %v724 = vunpack.c.h.b16 %v625
    %v725 = vunpack.c.l.b16 %v626
    %v726 = vunpack.c.h.b16 %v626
    %v727 = vunpack.c.l.b16 %v627
    %v728 = vunpack.c.h.b16 %v627
    %v729 = vunpack.c.l.b16 %v628
    %v730 = vunpack.c.h.b16 %v628
    %v731 = vunpack.c.l.b16 %v629
    %v732 = vunpack.c.h.b16 %v629
    %v733 = vunpack.c.l.b16 %v630
    %v734 = vunpack.c.h.b16 %v630
    %v735 = vunpack.c.l.b16 %v631
    %v736 = vunpack.c.h.b16 %v631
    %v737 = vunpack.c.l.b16 %v632
    %v738 = vunpack.c.h.b16 %v632
    %v739 = vunpack.c.l.b16 %v633
    %v740 = vunpack.c.h.b16 %v633
    %v741 = vunpack.c.l.b16 %v634
    %v742 = vunpack.c.h.b16 %v634
    %v743 = vpack.c.b16 %v681, %v679
    %v744 = vpack.c.b16 %v682, %v680
    %v745 = vpack.c.b16 %v685, %v683
    %v746 = vpack.c.b16 %v686, %v684
    %v747 = vpack.c.b16 %v689, %v687
    %v748 = vpack.c.b16 %v690, %v688
    %v749 = vpack.c.b16 %v693, %v691
    %v750 = vpack.c.b16 %v694, %v692
    %v751 = vpack.c.b16 %v697, %v695
    %v752 = vpack.c.b16 %v698, %v696
    %v753 = vpack.c.b16 %v701, %v699
    %v754 = vpack.c.b16 %v702, %v700
    %v755 = vpack.c.b16 %v705, %v703
    %v756 = vpack.c.b16 %v706, %v704
    %v757 = vpack.c.b16 %v709, %v707
    %v758 = vpack.c.b16 %v710, %v708
    %v759 = vpack.c.b16 %v713, %v711
    %v760 = vpack.c.b16 %v714, %v712
    %v761 = vpack.c.b16 %v717, %v715
    %v762 = vpack.c.b16 %v718, %v716
    %v763 = vpack.c.b16 %v721, %v719
    %v764 = vpack.c.b16 %v722, %v720
    %v765 = vpack.c.b16 %v725, %v723
    %v766 = vpack.c.b16 %v726, %v724
    %v767 = vpack.c.b16 %v729, %v727
    %v768 = vpack.c.b16 %v730, %v728
    %v769 = vpack.c.b16 %v733, %v731
    %v770 = vpack.c.b16 %v734, %v732
    %v771 = vpack.c.b16 %v737, %v735
    %v772 = vpack.c.b16 %v738, %v736
    %v773 = vpack.c.b16 %v741, %v739
    %v774 = vpack.c.b16 %v742, %v740
    %807 = vmatprep.subr.bf16.mxu0 %v744
    %808 = vmatpush1.bf16.msra.mxu0 %v743
    %809 = vmatprep.subr.bf16.mxu0 %v746
    %810 = vmatpush1.bf16.msra.mxu0 %v745
    %811 = vmatprep.subr.bf16.mxu0 %v748
    %812 = vmatpush1.bf16.msra.mxu0 %v747
    %813 = vmatprep.subr.bf16.mxu0 %v750
    %814 = vmatpush1.bf16.msra.mxu0 %v749
    %815 = vmatprep.subr.bf16.mxu0 %v752
    %816 = vmatpush1.bf16.msra.mxu0 %v751
    %817 = vmatprep.subr.bf16.mxu0 %v754
    %818 = vmatpush1.bf16.msra.mxu0 %v753
    %819 = vmatprep.subr.bf16.mxu0 %v756
    %820 = vmatpush1.bf16.msra.mxu0 %v755
    %821 = vmatprep.subr.bf16.mxu0 %v758
    %822 = vmatpush1.bf16.msra.mxu0 %v757
    %823 = vmatprep.subr.bf16.mxu0 %v760
    %824 = vmatpush1.bf16.msra.mxu0 %v759
    %825 = vmatprep.subr.bf16.mxu0 %v762
    %826 = vmatpush1.bf16.msra.mxu0 %v761
    %827 = vmatprep.subr.bf16.mxu0 %v764
    %828 = vmatpush1.bf16.msra.mxu0 %v763
    %829 = vmatprep.subr.bf16.mxu0 %v766
    %830 = vmatpush1.bf16.msra.mxu0 %v765
    %831 = vmatprep.subr.bf16.mxu0 %v768
    %832 = vmatpush1.bf16.msra.mxu0 %v767
    %833 = vmatprep.subr.bf16.mxu0 %v770
    %834 = vmatpush1.bf16.msra.mxu0 %v769
    %835 = vmatprep.subr.bf16.mxu0 %v772
    %836 = vmatpush1.bf16.msra.mxu0 %v771
    %837 = vmatprep.subr.bf16.mxu0 %v774
    %838 = vmatpush1.bf16.msra.mxu0 %v773
    %839 = vmatprep.mubr.bf16.mxu0 %v602
    %840 = vmatmul.mubr.bf16.gmra.mrb[0].mxu0 %v601
    %v841 = vpop.f32.mrb[0].mxu0
    %v842 = vadd.f32 %v640, %v841
    %v843 = vpop.f32.mrb[0].mxu0
    %v844 = vadd.f32 %v644, %v843
    %v845 = vpop.f32.mrb[0].mxu0
    %v846 = vadd.f32 %v640, %v845
    %v847 = vpop.f32.mrb[0].mxu0
    %v848 = vadd.f32 %v644, %v847
    %849 = vdwg.mxu0
    %vm850 = vcmp.gt.f32.partialorder %v842, 0.0
    %vm851 = vcmp.gt.f32.partialorder %v844, 0.0
    %vm852 = vcmp.gt.f32.partialorder %v846, 0.0
    %vm853 = vcmp.gt.f32.partialorder %v848, 0.0
    %v854 = vmul.f32 %v842, 1.442695
    %v855 = vpow.pop %v854
    %v856 = vmul.f32 %v844, 1.442695
    %v857 = vpow.pop %v856
    %v858 = vmul.f32 %v846, 1.442695
    %v859 = vpow.pop %v858
    %v860 = vmul.f32 %v848, 1.442695
    %v861 = vpow.pop %v860
    %v862 = vsub.f32 %v855, 1.0
    %v863 = vsub.f32 %v857, 1.0
    %v864 = vsub.f32 %v859, 1.0
    %v865 = vsub.f32 %v861, 1.0
    %v866 = vsel %vm850, %v842, %v862
    %v867 = vsel %vm851, %v844, %v863
    %v868 = vsel %vm852, %v846, %v864
    %v869 = vsel %vm853, %v848, %v865
    %v870 = vpack.c.bf16 %v868, %v866
    %v871 = vpack.c.bf16 %v869, %v867
    %v872 = vld [vmem:[#allocation9] sm:$0xf]
    %v873 = vld [vmem:[#allocation9 + $0x4] sm:$0xf]
    %v874 = vld [vmem:[#allocation9 + $0x8] sm:$0xf]
    %v875 = vld [vmem:[#allocation9 + $0xc] sm:$0xf]
    %v876 = vld [vmem:[#allocation9 + $0x10] sm:$0xf]
    %v877 = vld [vmem:[#allocation9 + $0x14] sm:$0xf]
    %v878 = vld [vmem:[#allocation9 + $0x18] sm:$0xf]
    %v879 = vld [vmem:[#allocation9 + $0x1c] sm:$0xf]
    %v880 = vld [vmem:[#allocation9 + $0x20] sm:$0xf]
    %v881 = vld [vmem:[#allocation9 + $0x24] sm:$0xf]
    %v882 = vld [vmem:[#allocation9 + $0x28] sm:$0xf]
    %v883 = vld [vmem:[#allocation9 + $0x2c] sm:$0xf]
    %v884 = vld [vmem:[#allocation9 + $0x30] sm:$0xf]
    %v885 = vld [vmem:[#allocation9 + $0x34] sm:$0xf]
    %v886 = vld [vmem:[#allocation9 + $0x38] sm:$0xf]
    %v887 = vld [vmem:[#allocation9 + $0x3c] sm:$0xf]
    %v888 = vld [vmem:[#allocation9 + $0x40] sm:$0xf]
    %v889 = vld [vmem:[#allocation9 + $0x44] sm:$0xf]
    %v890 = vld [vmem:[#allocation9 + $0x48] sm:$0xf]
    %v891 = vld [vmem:[#allocation9 + $0x4c] sm:$0xf]
    %v892 = vld [vmem:[#allocation9 + $0x50] sm:$0xf]
    %v893 = vld [vmem:[#allocation9 + $0x54] sm:$0xf]
    %v894 = vld [vmem:[#allocation9 + $0x58] sm:$0xf]
    %v895 = vld [vmem:[#allocation9 + $0x5c] sm:$0xf]
    %v896 = vld [vmem:[#allocation9 + $0x60] sm:$0xf]
    %v897 = vld [vmem:[#allocation9 + $0x64] sm:$0xf]
    %v898 = vld [vmem:[#allocation9 + $0x68] sm:$0xf]
    %v899 = vld [vmem:[#allocation9 + $0x6c] sm:$0xf]
    %v900 = vld [vmem:[#allocation9 + $0x70] sm:$0xf]
    %v901 = vld [vmem:[#allocation9 + $0x74] sm:$0xf]
    %v902 = vld [vmem:[#allocation9 + $0x78] sm:$0xf]
    %v903 = vld [vmem:[#allocation9 + $0x7c] sm:$0xf]
    %v904 = vld [vmem:[%s12] sm:$0x1]
    %v906 = vlaneseq
    %v907 = vshrl.u32 %v906, 7
    %v908 = vsub.s32 0, %v907
    %v909 = vrot.slane %v904, %v908
    %v943 = vunpack.c.l.b16 %v872
    %v944 = vunpack.c.l.b16 %v873
    %v945 = vunpack.c.l.b16 %v874
    %v946 = vunpack.c.l.b16 %v875
    %v947 = vunpack.c.l.b16 %v876
    %v948 = vunpack.c.l.b16 %v877
    %v949 = vunpack.c.l.b16 %v878
    %v950 = vunpack.c.l.b16 %v879
    %v951 = vunpack.c.l.b16 %v880
    %v952 = vunpack.c.l.b16 %v881
    %v953 = vunpack.c.l.b16 %v882
    %v954 = vunpack.c.l.b16 %v883
    %v955 = vunpack.c.l.b16 %v884
    %v956 = vunpack.c.l.b16 %v885
    %v957 = vunpack.c.l.b16 %v886
    %v958 = vunpack.c.l.b16 %v887
    %v959 = vunpack.c.l.b16 %v888
    %v960 = vunpack.c.l.b16 %v889
    %v961 = vunpack.c.l.b16 %v890
    %v962 = vunpack.c.l.b16 %v891
    %v963 = vunpack.c.l.b16 %v892
    %v964 = vunpack.c.l.b16 %v893
    %v965 = vunpack.c.l.b16 %v894
    %v966 = vunpack.c.l.b16 %v895
    %v967 = vunpack.c.l.b16 %v896
    %v968 = vunpack.c.l.b16 %v897
    %v969 = vunpack.c.l.b16 %v898
    %v970 = vunpack.c.l.b16 %v899
    %v971 = vunpack.c.l.b16 %v900
    %v972 = vunpack.c.l.b16 %v901
    %v973 = vunpack.c.l.b16 %v902
    %v974 = vunpack.c.l.b16 %v903
    %v975 = vpack.c.b16 %v944, %v943
    %v976 = vpack.c.b16 %v946, %v945
    %v977 = vpack.c.b16 %v948, %v947
    %v978 = vpack.c.b16 %v950, %v949
    %v979 = vpack.c.b16 %v952, %v951
    %v980 = vpack.c.b16 %v954, %v953
    %v981 = vpack.c.b16 %v956, %v955
    %v982 = vpack.c.b16 %v958, %v957
    %v983 = vpack.c.b16 %v960, %v959
    %v984 = vpack.c.b16 %v962, %v961
    %v985 = vpack.c.b16 %v964, %v963
    %v986 = vpack.c.b16 %v966, %v965
    %v987 = vpack.c.b16 %v968, %v967
    %v988 = vpack.c.b16 %v970, %v969
    %v989 = vpack.c.b16 %v972, %v971
    %v990 = vpack.c.b16 %v974, %v973
    %1007 = vmatprep.subr.bf16.mxu0 0
    %1008 = vmatpush1.bf16.msra.mxu0 %v975
    %1009 = vmatprep.subr.bf16.mxu0 0
    %1010 = vmatpush1.bf16.msra.mxu0 %v976
    %1011 = vmatprep.subr.bf16.mxu0 0
    %1012 = vmatpush1.bf16.msra.mxu0 %v977
    %1013 = vmatprep.subr.bf16.mxu0 0
    %1014 = vmatpush1.bf16.msra.mxu0 %v978
    %1015 = vmatprep.subr.bf16.mxu0 0
    %1016 = vmatpush1.bf16.msra.mxu0 %v979
    %1017 = vmatprep.subr.bf16.mxu0 0
    %1018 = vmatpush1.bf16.msra.mxu0 %v980
    %1019 = vmatprep.subr.bf16.mxu0 0
    %1020 = vmatpush1.bf16.msra.mxu0 %v981
    %1021 = vmatprep.subr.bf16.mxu0 0
    %1022 = vmatpush1.bf16.msra.mxu0 %v982
    %1023 = vmatprep.subr.bf16.mxu0 0
    %1024 = vmatpush1.bf16.msra.mxu0 %v983
    %1025 = vmatprep.subr.bf16.mxu0 0
    %1026 = vmatpush1.bf16.msra.mxu0 %v984
    %1027 = vmatprep.subr.bf16.mxu0 0
    %1028 = vmatpush1.bf16.msra.mxu0 %v985
    %1029 = vmatprep.subr.bf16.mxu0 0
    %1030 = vmatpush1.bf16.msra.mxu0 %v986
    %1031 = vmatprep.subr.bf16.mxu0 0
    %1032 = vmatpush1.bf16.msra.mxu0 %v987
    %1033 = vmatprep.subr.bf16.mxu0 0
    %1034 = vmatpush1.bf16.msra.mxu0 %v988
    %1035 = vmatprep.subr.bf16.mxu0 0
    %1036 = vmatpush1.bf16.msra.mxu0 %v989
    %1037 = vmatprep.subr.bf16.mxu0 0
    %1038 = vmatpush1.bf16.msra.mxu0 %v990
    %1039 = vmatprep.mubr.bf16.mxu0 %v871
    %1040 = vmatmul.mubr.bf16.gmra.mrb[0].mxu0 %v870
    %v1041 = vpop.f32.mrb[0].mxu0
    %v1042 = vadd.f32 %v909, %v1041
    %v1043 = vpop.f32.mrb[0].mxu0
    %v1044 = vpop.f32.mrb[0].mxu0
    %v1045 = vadd.f32 %v909, %v1044
    %v1046 = vpop.f32.mrb[0].mxu0
    %1047 = vdwg.mxu0
    %vm1048 = vcmask 64512
    %1049 = vst.msk [vmem:[%s13] sm:$0xff] %vm1048, %v1042
    %1050 = vst.msk [vmem:[%s13 + $0x8] sm:$0xff] %vm1048, %v1045
    // Predicated region
    $region74: #{tpu_custom_call.1} parent=1 // pred_check
      _
    $region75: #{tpu_custom_call.1} parent=1 // pred_check_branch
      %1052 = sbr.rel (0) target = $region77
    $region76: #{tpu_custom_call.1} parent=1 // pred_region
      _
    $region77: #{tpu_custom_call.1} parent=1 // pred_fallthru
      _
    // Predicated region
    $region78: #{tpu_custom_call.1} parent=1 // pred_check
      _
    $region79: #{tpu_custom_call.1} parent=1 // pred_check_branch
      %1054 = sbr.rel (0) target = $region81
    $region80: #{tpu_custom_call.1} parent=1 // pred_region
      _
    $region81: #{tpu_custom_call.1} parent=1 // pred_fallthru
      _
    %1055 = vsyncpa [#allocation3], 1
    %1056 = vsyncpa [#allocation5], 1
    %1057 = vsyncpa [#allocation8], 1

</llo_original>
